<compile_context>
chip_gen: v7x
topology: tpu7x:2x2x1
jax: 0.10.0
libtpu: 0.0.40
codegen_flags: <defaults>
</compile_context>

<pallas_src>
import functools

import jax
import jax.numpy as jnp
from jax import lax
from jax.experimental import pallas as pl
from jax.experimental.pallas import tpu as pltpu

LANES = 128
SUBLANES = 8
MAX_TILE_ROWS = 4096  # 2 MiB per f32 input tile


def _num_tensorcores():
    """Best-effort TensorCores-per-chip query; safe fallback to 1."""
    try:
        info = pltpu.get_tpu_info()
    except Exception:
        return 1
    for attr in ("num_cores", "num_tensorcores", "tensorcore_count",
                 "cores_per_chip", "num_cores_per_chip"):
        v = getattr(info, attr, None)
        if isinstance(v, int) and v > 0:
            return v
    return 1


def _mask_l1_kernel(pred_ref, gt_ref, mask_ref, out_ref, num_acc, den_acc,
                    *, total_rows, nb, need_mask):
    j = pl.program_id(1)

    # Zero the per-split vreg-shaped accumulators at the start of each split.
    @pl.when(j == 0)
    def _():
        num_acc[...] = jnp.zeros_like(num_acc)
        den_acc[...] = jnp.zeros_like(den_acc)

    p = pred_ref[...].astype(jnp.float32)
    g = gt_ref[...].astype(jnp.float32)
    m = mask_ref[...].astype(jnp.float32)

    tile_rows = p.shape[0]
    sub = tile_rows // SUBLANES  # wrapper guarantees tile_rows % 8 == 0

    def accumulate(mask_vals):
        # Mask only `m`; `diff` inherits the zeros through the multiply.
        d = jnp.abs(p - g) * mask_vals
        # Sublane-aligned in-tile tree reduce: pure VPU adds (no XLU), and
        # only one (8,128) vreg read-modify-write per accumulator per step.
        num_acc[...] += jnp.sum(d.reshape(sub, SUBLANES, LANES), axis=0)
        den_acc[...] += jnp.sum(mask_vals.reshape(sub, SUBLANES, LANES), axis=0)

    if need_mask:
        blk = pl.program_id(0) * pl.num_programs(1) + j
        is_edge = blk >= nb - 1  # ragged last block or clamped duplicate

        @pl.when(jnp.logical_not(is_edge))
        def _():
            accumulate(m)  # steady-state fast path: no iota/compare/select

        @pl.when(is_edge)
        def _():
            row_ids = blk * tile_rows + lax.broadcasted_iota(
                jnp.int32, (tile_rows, LANES), 0)
            accumulate(jnp.where(row_ids < total_rows, m, 0.0))
    else:
        accumulate(m)

    # Epilogue: single cross-lane XLU reduction per split; emit one lane-dense
    # (1, 128) row (num in lane 0, den in lane 1) with an unmasked store.
    @pl.when(j == pl.num_programs(1) - 1)
    def _():
        num_s = jnp.sum(num_acc[...])
        den_s = jnp.sum(den_acc[...])
        lane = lax.broadcasted_iota(jnp.int32, (1, LANES), 1)
        out_ref[...] = jnp.where(lane == 0, num_s,
                                 jnp.where(lane == 1, den_s, 0.0))


def mask_l1_loss(pred, gt, mask, eps=1e-6):
    """Masked L1 loss: sum(|pred - gt| * mask) / (sum(mask) + eps).

    Inputs stream in their native dtype and are upcast to f32 inside the
    kernel, so keep `mask` (bool/int8/bf16) and, if possible, pred/gt (bf16)
    narrow at the call site to cut HBM traffic of this memory-bound kernel.
    """
    assert pred.shape == gt.shape == mask.shape
    n = pred.size
    eps = jnp.float32(eps)

    pred_f = pred.reshape(-1)
    gt_f = gt.reshape(-1)
    mask_f = mask.reshape(-1)

    vreg = SUBLANES * LANES  # 1024 elements
    n_main = (n // vreg) * vreg
    rows = n_main // LANES   # multiple of 8 by construction

    # Tiny (<1024 element) tail in plain JAX: no pad/copy pass in the wrapper
    # and the kernel rows stay a multiple of the 8-sublane vreg height.
    if n_main < n:
        pt = pred_f[n_main:].astype(jnp.float32)
        gtt = gt_f[n_main:].astype(jnp.float32)
        mt = mask_f[n_main:].astype(jnp.float32)
        tail_num = jnp.sum(jnp.abs(pt - gtt) * mt)
        tail_den = jnp.sum(mt)
    else:
        tail_num = jnp.float32(0.0)
        tail_den = jnp.float32(0.0)

    if rows == 0:
        return tail_num / (tail_den + eps)

    p2 = pred_f[:n_main].reshape(rows, LANES)
    g2 = gt_f[:n_main].reshape(rows, LANES)
    m2 = mask_f[:n_main].reshape(rows, LANES)

    tile_rows = rows if rows < MAX_TILE_ROWS else MAX_TILE_ROWS
    nb = pl.cdiv(rows, tile_rows)

    # Split the reduction across TensorCores only on multi-TC chips (v7x);
    # single-TC chips (v5e/v6e) never pay duplicate-block traffic.
    cores = _num_tensorcores()
    num_splits = 2 if (cores >= 2 and nb >= 2) else 1
    bps = pl.cdiv(nb, num_splits)  # inner-grid blocks per split

    need_mask = (num_splits * bps * tile_rows) != rows

    kernel = functools.partial(
        _mask_l1_kernel, total_rows=rows, nb=nb, need_mask=need_mask)

    # Clamp the block index so the (possible) extra inner step of the last
    # split re-reads a valid block; its contribution is zeroed by the edge
    # mask inside the kernel.
    def in_idx(s, j, _bps=bps, _nb=nb):
        return (jnp.minimum(s * _bps + j, _nb - 1), 0)

    in_block = pl.BlockSpec((tile_rows, LANES), in_idx)
    # TODO(synk): optionally sweep pipeline_mode=pl.Buffered(3) on v7x.

    if num_splits > 1:
        lead = getattr(pltpu, "CORE_PARALLEL", "parallel")
        dim_sem = (lead, "arbitrary")
    else:
        dim_sem = ("arbitrary", "arbitrary")

    partials = pl.pallas_call(
        kernel,
        out_shape=jax.ShapeDtypeStruct((num_splits, LANES), jnp.float32),
        grid_spec=pltpu.PrefetchScalarGridSpec(
            num_scalar_prefetch=0,
            grid=(num_splits, bps),
            in_specs=[in_block, in_block, in_block],
            out_specs=pl.BlockSpec((1, LANES), lambda s, j: (s, 0)),
            scratch_shapes=[
                pltpu.VMEM((SUBLANES, LANES), jnp.float32),  # numerator acc
                pltpu.VMEM((SUBLANES, LANES), jnp.float32),  # denominator acc
            ],
        ),
        compiler_params=pltpu.CompilerParams(
            dimension_semantics=dim_sem,
            vmem_limit_bytes=32 * 1024 * 1024),
    )(p2, g2, m2)

    num = jnp.sum(partials[:, 0]) + tail_num
    den = jnp.sum(partials[:, 1]) + tail_den
    return num / (den + eps)


if __name__ == "__main__":
    key = jax.random.PRNGKey(0)
    k1, k2, k3 = jax.random.split(key, 3)

    shape = (2, 4, 16, 16)  # NCHW
    pred = jax.random.normal(k1, shape, dtype=jnp.float32)
    gt = jax.random.normal(k2, shape, dtype=jnp.float32)
    mask = (jax.random.uniform(k3, shape) > 0.5).astype(jnp.float32)

    loss = mask_l1_loss(pred, gt, mask, eps=1e-6)
    loss = jax.block_until_ready(loss)

    # Reference check in plain JAX.
    ref = jnp.sum(jnp.abs(pred - gt) * mask) / (jnp.sum(mask) + 1e-6)
    assert jnp.allclose(loss, ref, rtol=1e-5, atol=1e-6), (loss, ref)

    print("KERNEL_OK")
</pallas_src>

<mosaic_0001>
module attributes {stable_mosaic.version = 11 : i64} {
  func.func @_mask_l1_kernel(%arg0: i32, %arg1: i32, %arg2: memref<16x128xf32, #tpu.memory_space<vmem>>, %arg3: memref<16x128xf32, #tpu.memory_space<vmem>>, %arg4: memref<16x128xf32, #tpu.memory_space<vmem>>, %arg5: memref<1x128xf32, #tpu.memory_space<vmem>>, %arg6: memref<8x128xf32, #tpu.memory_space<vmem>>, %arg7: memref<8x128xf32, #tpu.memory_space<vmem>>) attributes {dimension_semantics = [#tpu.dimension_semantics<arbitrary>, #tpu.dimension_semantics<arbitrary>], iteration_bounds = array<i64: 1, 1>, scalar_prefetch = 0 : i64, scratch_operands = 2 : i64, tpu.core_type = #tpu.core_type<tc>, window_params = [{transform_indices = @transform_0, window_bounds = array<i64: 16, 128>}, {transform_indices = @transform_1, window_bounds = array<i64: 16, 128>}, {transform_indices = @transform_2, window_bounds = array<i64: 16, 128>}, {transform_indices = @transform_3, window_bounds = array<i64: 1, 128>}]} {
    %c0_i32 = arith.constant 0 : i32
    %0 = arith.cmpi eq, %arg1, %c0_i32 : i32
    %1 = arith.extui %0 : i1 to i32
    %c0_i32_0 = arith.constant 0 : i32
    %2 = arith.cmpi ne, %1, %c0_i32_0 : i32
    scf.if %2 {
      %cst_17 = arith.constant 0.000000e+00 : f32
      %22 = vector.broadcast %cst_17 : f32 to vector<8x128xf32>
      %c0_18 = arith.constant 0 : index
      %c0_19 = arith.constant 0 : index
      %23 = vector.load %arg6[%c0_18, %c0_19] : memref<8x128xf32, #tpu.memory_space<vmem>>, vector<8x128xf32>
      tpu.vector_store %arg6[%c0_18, %c0_19], %22 {strides = array<i32>} : memref<8x128xf32, #tpu.memory_space<vmem>>, vector<8x128xf32>,
      %cst_20 = arith.constant 0.000000e+00 : f32
      %24 = vector.broadcast %cst_20 : f32 to vector<8x128xf32>
      %c0_21 = arith.constant 0 : index
      %c0_22 = arith.constant 0 : index
      %25 = vector.load %arg7[%c0_21, %c0_22] : memref<8x128xf32, #tpu.memory_space<vmem>>, vector<8x128xf32>
      tpu.vector_store %arg7[%c0_21, %c0_22], %24 {strides = array<i32>} : memref<8x128xf32, #tpu.memory_space<vmem>>, vector<8x128xf32>,
    } else {
    }
    %c0 = arith.constant 0 : index
    %c0_1 = arith.constant 0 : index
    %3 = vector.load %arg2[%c0, %c0_1] : memref<16x128xf32, #tpu.memory_space<vmem>>, vector<16x128xf32>
    %c0_2 = arith.constant 0 : index
    %c0_3 = arith.constant 0 : index
    %4 = vector.load %arg3[%c0_2, %c0_3] : memref<16x128xf32, #tpu.memory_space<vmem>>, vector<16x128xf32>
    %c0_4 = arith.constant 0 : index
    %c0_5 = arith.constant 0 : index
    %5 = vector.load %arg4[%c0_4, %c0_5] : memref<16x128xf32, #tpu.memory_space<vmem>>, vector<16x128xf32>
    %6 = arith.subf %3, %4 : vector<16x128xf32>
    %7 = math.absf %6 : vector<16x128xf32>
    %8 = arith.mulf %7, %5 : vector<16x128xf32>
    %c0_6 = arith.constant 0 : index
    %c0_7 = arith.constant 0 : index
    %9 = vector.load %arg6[%c0_6, %c0_7] : memref<8x128xf32, #tpu.memory_space<vmem>>, vector<8x128xf32>
    %10 = vector.shape_cast %8 : vector<16x128xf32> to vector<2x8x128xf32>
    %cst = arith.constant dense<0.000000e+00> : vector<8x128xf32>
    %11 = vector.multi_reduction <add>, %10, %cst [0] : vector<2x8x128xf32> to vector<8x128xf32>
    %12 = arith.addf %9, %11 : vector<8x128xf32>
    %c0_8 = arith.constant 0 : index
    %c0_9 = arith.constant 0 : index
    %13 = vector.load %arg6[%c0_8, %c0_9] : memref<8x128xf32, #tpu.memory_space<vmem>>, vector<8x128xf32>
    tpu.vector_store %arg6[%c0_8, %c0_9], %12 {strides = array<i32>} : memref<8x128xf32, #tpu.memory_space<vmem>>, vector<8x128xf32>,
    %c0_10 = arith.constant 0 : index
    %c0_11 = arith.constant 0 : index
    %14 = vector.load %arg7[%c0_10, %c0_11] : memref<8x128xf32, #tpu.memory_space<vmem>>, vector<8x128xf32>
    %15 = vector.shape_cast %5 : vector<16x128xf32> to vector<2x8x128xf32>
    %cst_12 = arith.constant dense<0.000000e+00> : vector<8x128xf32>
    %16 = vector.multi_reduction <add>, %15, %cst_12 [0] : vector<2x8x128xf32> to vector<8x128xf32>
    %17 = arith.addf %14, %16 : vector<8x128xf32>
    %c0_13 = arith.constant 0 : index
    %c0_14 = arith.constant 0 : index
    %18 = vector.load %arg7[%c0_13, %c0_14] : memref<8x128xf32, #tpu.memory_space<vmem>>, vector<8x128xf32>
    tpu.vector_store %arg7[%c0_13, %c0_14], %17 {strides = array<i32>} : memref<8x128xf32, #tpu.memory_space<vmem>>, vector<8x128xf32>,
    %c0_i32_15 = arith.constant 0 : i32
    %19 = arith.cmpi eq, %arg1, %c0_i32_15 : i32
    %20 = arith.extui %19 : i1 to i32
    %c0_i32_16 = arith.constant 0 : i32
    %21 = arith.cmpi ne, %20, %c0_i32_16 : i32
    scf.if %21 {
      %c0_17 = arith.constant 0 : index
      %c0_18 = arith.constant 0 : index
      %22 = vector.load %arg6[%c0_17, %c0_18] : memref<8x128xf32, #tpu.memory_space<vmem>>, vector<8x128xf32>
      %23 = vector.shape_cast %22 : vector<8x128xf32> to vector<1x8x128xf32>
      %cst_19 = arith.constant dense<0.000000e+00> : vector<1xf32>
      %24 = vector.multi_reduction <add>, %23, %cst_19 [1, 2] : vector<1x8x128xf32> to vector<1xf32>
      %25 = vector.shape_cast %24 : vector<1xf32> to vector<1x1x1xf32>
      %26 = vector.extract %25[0, 0, 0] : f32 from vector<1x1x1xf32>
      %c0_20 = arith.constant 0 : index
      %c0_21 = arith.constant 0 : index
      %27 = vector.load %arg7[%c0_20, %c0_21] : memref<8x128xf32, #tpu.memory_space<vmem>>, vector<8x128xf32>
      %28 = vector.shape_cast %27 : vector<8x128xf32> to vector<1x8x128xf32>
      %cst_22 = arith.constant dense<0.000000e+00> : vector<1xf32>
      %29 = vector.multi_reduction <add>, %28, %cst_22 [1, 2] : vector<1x8x128xf32> to vector<1xf32>
      %30 = vector.shape_cast %29 : vector<1xf32> to vector<1x1x1xf32>
      %31 = vector.extract %30[0, 0, 0] : f32 from vector<1x1x1xf32>
      %32 = tpu.iota {dimensions = array<i32: 1>} : vector<1x128xi32>
      %c0_i32_23 = arith.constant 0 : i32
      %33 = vector.broadcast %c0_i32_23 : i32 to vector<1x128xi32>
      %34 = arith.cmpi eq, %32, %33 : vector<1x128xi32>
      %c1_i32 = arith.constant 1 : i32
      %35 = vector.broadcast %c1_i32 : i32 to vector<1x128xi32>
      %36 = arith.cmpi eq, %32, %35 : vector<1x128xi32>
      %cst_24 = arith.constant 0.000000e+00 : f32
      %37 = vector.broadcast %31 : f32 to vector<1x128xf32>
      %38 = vector.broadcast %cst_24 : f32 to vector<1x128xf32>
      %39 = arith.select %36, %37, %38 : vector<1x128xi1>, vector<1x128xf32>
      %40 = vector.broadcast %26 : f32 to vector<1x128xf32>
      %41 = arith.select %34, %40, %39 : vector<1x128xi1>, vector<1x128xf32>
      %c0_25 = arith.constant 0 : index
      %c0_26 = arith.constant 0 : index
      %42 = vector.load %arg5[%c0_25, %c0_26] : memref<1x128xf32, #tpu.memory_space<vmem>>, vector<1x128xf32>
      tpu.vector_store %arg5[%c0_25, %c0_26], %41 {strides = array<i32>} : memref<1x128xf32, #tpu.memory_space<vmem>>, vector<1x128xf32>,
    } else {
    }
    return
  }
  func.func @transform_0(%arg0: i32, %arg1: i32) -> (i32, i32) {
    %c1_i32 = arith.constant 1 : i32
    %0 = arith.muli %arg0, %c1_i32 : i32
    %1 = arith.addi %0, %arg1 : i32
    %c0_i32 = arith.constant 0 : i32
    %2 = arith.minsi %1, %c0_i32 : i32
    %c0_i32_0 = arith.constant 0 : i32
    %c0_i32_1 = arith.constant 0 : i32
    return %2, %c0_i32_0 : i32, i32
  }
  func.func @transform_1(%arg0: i32, %arg1: i32) -> (i32, i32) {
    %c1_i32 = arith.constant 1 : i32
    %0 = arith.muli %arg0, %c1_i32 : i32
    %1 = arith.addi %0, %arg1 : i32
    %c0_i32 = arith.constant 0 : i32
    %2 = arith.minsi %1, %c0_i32 : i32
    %c0_i32_0 = arith.constant 0 : i32
    %c0_i32_1 = arith.constant 0 : i32
    return %2, %c0_i32_0 : i32, i32
  }
  func.func @transform_2(%arg0: i32, %arg1: i32) -> (i32, i32) {
    %c1_i32 = arith.constant 1 : i32
    %0 = arith.muli %arg0, %c1_i32 : i32
    %1 = arith.addi %0, %arg1 : i32
    %c0_i32 = arith.constant 0 : i32
    %2 = arith.minsi %1, %c0_i32 : i32
    %c0_i32_0 = arith.constant 0 : i32
    %c0_i32_1 = arith.constant 0 : i32
    return %2, %c0_i32_0 : i32, i32
  }
  func.func @transform_3(%arg0: i32, %arg1: i32) -> (i32, i32) {
    %c0_i32 = arith.constant 0 : i32
    %c0_i32_0 = arith.constant 0 : i32
    return %arg0, %c0_i32 : i32, i32
  }
}

</mosaic_0001>

<llo_original>
// kernel: tpu_custom_call.1
$region0: #{tpu_custom_call.1}
  #allocation0 [shape = 'u32[]', space=smem, size = 0x4, offset = 0x4, fixed_abs, tag = 'smem constant byte address 0x4 - core index']
  #allocation1 [shape = 'u32[144,128]{1,0:T(1,128)}', space=vmem, size = 0x12000, scoped, tag = 'internal scratch']
  #allocation2 [shape = 'f32[8,128]{1,0:T(8,128)}', space=vmem, size = 0x1000, scoped, tag = 'scratch operand']
  #allocation3 [shape = 'f32[8,128]{1,0:T(8,128)}', space=vmem, size = 0x1000, scoped, tag = 'scratch operand']
  %s0 = inlined_call_operand.hbm [shape: f32[16,128], index: 0, kind: input, shape index: {}]
  %s1 = inlined_call_operand.hbm [shape: f32[16,128], index: 1, kind: input, shape index: {}]
  %s2 = inlined_call_operand.hbm [shape: f32[16,128], index: 2, kind: input, shape index: {}]
  %s3 = inlined_call_operand.hbm [shape: f32[1,128], index: 3, kind: output, shape index: {}]
  %s4 = sld [smem:[#allocation0]]
  $region42: #{tpu_custom_call.1} parent=0
    _
  %s6 = ssub.s32 1, %s4
  %s7 = scalar_select 0, %s6, %s4
  $region1: #{tpu_custom_call.1} parent=0
    #allocation4 [shape = 'u8[8192]{0}', space=vmem, size = 0x2000, scoped, tag = 'input window, operand 0, single buffered']
    #allocation5 [shape = 's32[1]{0}', space=sflag, size = 0x4, scoped, tag = 'scoped memory for tpu_custom_call.1']
    #allocation6 [shape = 's32[1]{0}', space=sflag, size = 0x4, scoped, tag = 'scoped memory for tpu_custom_call.1']
    #allocation7 [shape = 'u8[8192]{0}', space=vmem, size = 0x2000, scoped, tag = 'input window, operand 1, single buffered']
    #allocation8 [shape = 's32[1]{0}', space=sflag, size = 0x4, scoped, tag = 'scoped memory for tpu_custom_call.1']
    #allocation9 [shape = 'u8[8192]{0}', space=vmem, size = 0x2000, scoped, tag = 'input window, operand 2, single buffered']
    #allocation10 [shape = 'u8[512]{0}', space=vmem, size = 0x400, scoped, tag = 'output window, operand 0, single buffered']
    %8 = vsyncpa [#allocation5], 0
    %9 = vsyncpa [#allocation8], 0
    %10 = vsyncpa [#allocation6], 0
    // Predicated region
    $region2: #{tpu_custom_call.1} parent=1 // pred_check
      _
    $region3: #{tpu_custom_call.1} parent=1 // pred_check_branch
      %12 = sbr.rel (0) target = $region5
    $region4: #{tpu_custom_call.1} parent=1 // pred_region
      %s13 = sadd.s32 0, 0
      %p14 = scmp.lt.s32.totalorder %s13, 0
      %s15 = scalar_select %p14, %s13, 0
      %s16 = smul.u32 2, %s15
      %s18 = ssub.s32 256, 256
      %19 = vsyncadd [#allocation5], %s18
      %s20 = smul.addr %s16, 128
      %s21 = scalar_lea.hbm %s0, %s20
      %s22 = sshll.u32 [#allocation4], 4
      %s23 = int_to_ptr.vmem [resolvable:$true] %s22
      %28 = dma.hbm_to_vmem [thread:$0]  %s21, 256, %s23, [#allocation5], 128, 128, 8
    $region5: #{tpu_custom_call.1} parent=1 // pred_fallthru
      _
    // Predicated region
    $region6: #{tpu_custom_call.1} parent=1 // pred_check
      _
    $region7: #{tpu_custom_call.1} parent=1 // pred_check_branch
      %30 = sbr.rel (0) target = $region9
    $region8: #{tpu_custom_call.1} parent=1 // pred_region
      %s31 = sadd.s32 0, 0
      %p32 = scmp.lt.s32.totalorder %s31, 0
      %s33 = scalar_select %p32, %s31, 0
      %s34 = smul.u32 2, %s33
      %s36 = ssub.s32 256, 256
      %37 = vsyncadd [#allocation8], %s36
      %s38 = smul.addr %s34, 128
      %s39 = scalar_lea.hbm %s1, %s38
      %s40 = sshll.u32 [#allocation7], 4
      %s41 = int_to_ptr.vmem [resolvable:$true] %s40
      %46 = dma.hbm_to_vmem [thread:$0]  %s39, 256, %s41, [#allocation8], 128, 128, 8
    $region9: #{tpu_custom_call.1} parent=1 // pred_fallthru
      _
    // Predicated region
    $region10: #{tpu_custom_call.1} parent=1 // pred_check
      _
    $region11: #{tpu_custom_call.1} parent=1 // pred_check_branch
      %48 = sbr.rel (0) target = $region13
    $region12: #{tpu_custom_call.1} parent=1 // pred_region
      %s49 = sadd.s32 0, 0
      %p50 = scmp.lt.s32.totalorder %s49, 0
      %s51 = scalar_select %p50, %s49, 0
      %s52 = smul.u32 2, %s51
      %s54 = ssub.s32 256, 256
      %55 = vsyncadd [#allocation8], %s54
      %s56 = smul.addr %s52, 128
      %s57 = scalar_lea.hbm %s2, %s56
      %s58 = sshll.u32 [#allocation9], 4
      %s59 = int_to_ptr.vmem [resolvable:$true] %s58
      %64 = dma.hbm_to_vmem [thread:$0]  %s57, 256, %s59, [#allocation8], 128, 128, 8
    $region13: #{tpu_custom_call.1} parent=1 // pred_fallthru
      _
    // Predicated region
    $region14: #{tpu_custom_call.1} parent=1 // pred_check
      _
    $region15: #{tpu_custom_call.1} parent=1 // pred_check_branch
      %66 = sbr.rel (0) target = $region17
    $region16: #{tpu_custom_call.1} parent=1 // pred_region
      %67 = dma.done [#allocation5], 256
    $region17: #{tpu_custom_call.1} parent=1 // pred_fallthru
      _
    // Predicated region
    $region18: #{tpu_custom_call.1} parent=1 // pred_check
      _
    $region19: #{tpu_custom_call.1} parent=1 // pred_check_branch
      %69 = sbr.rel (0) target = $region21
    $region20: #{tpu_custom_call.1} parent=1 // pred_region
      %70 = dma.done [#allocation8], 256
    $region21: #{tpu_custom_call.1} parent=1 // pred_fallthru
      _
    // Predicated region
    $region22: #{tpu_custom_call.1} parent=1 // pred_check
      _
    $region23: #{tpu_custom_call.1} parent=1 // pred_check_branch
      %72 = sbr.rel (0) target = $region25
    $region24: #{tpu_custom_call.1} parent=1 // pred_region
      %73 = dma.done [#allocation8], 256
    $region25: #{tpu_custom_call.1} parent=1 // pred_fallthru
      _
    %s74 = sadd.s32 0, 0
    %p75 = scmp.lt.s32.totalorder %s74, 0
    %s76 = scalar_select %p75, %s74, 0
    %s77 = smul.u32 2, %s76
    %s78 = sadd.s32 0, 0
    %p79 = scmp.lt.s32.totalorder %s78, 0
    %s80 = scalar_select %p79, %s78, 0
    %s81 = smul.u32 2, %s80
    %s82 = sadd.s32 0, 0
    %p83 = scmp.lt.s32.totalorder %s82, 0
    %s84 = scalar_select %p83, %s82, 0
    %s85 = smul.u32 2, %s84
    %p86 = scmp.eq.s32.totalorder 0, 0
    // Predicated region
    $region26: #{tpu_custom_call.1} parent=1 // pred_check
      %p87 = pneg %p86
    $region27: #{tpu_custom_call.1} parent=1 // pred_check_branch
      %89 = sbr.rel (%p87) target = $region29
    $region28: #{tpu_custom_call.1} parent=1 // pred_region
      %90 = vst [vmem:[#allocation2] sm:$0xff] 0.0
      %91 = vst [vmem:[#allocation3] sm:$0xff] 0.0
    $region29: #{tpu_custom_call.1} parent=1 // pred_fallthru
      _
    %v92 = vld [vmem:[#allocation4] sm:$0xff]
    %v93 = vld [vmem:[#allocation4 + $0x8] sm:$0xff]
    %v94 = vld [vmem:[#allocation7] sm:$0xff]
    %v95 = vld [vmem:[#allocation7 + $0x8] sm:$0xff]
    %v96 = vld [vmem:[#allocation9] sm:$0xff]
    %v97 = vld [vmem:[#allocation9 + $0x8] sm:$0xff]
    %v98 = vsub.f32 %v92, %v94
    %v99 = vsub.f32 %v93, %v95
    %v100 = vand.u32 2147483647, %v98
    %v101 = vand.u32 2147483647, %v99
    %v102 = vmul.f32 %v100, %v96
    %v103 = vmul.f32 %v101, %v97
    %v104 = vld [vmem:[#allocation2] sm:$0xff]
    %v105 = vadd.f32 %v102, %v103
    %v106 = vadd.f32 %v104, %v105
    %107 = vst [vmem:[#allocation2] sm:$0xff] %v106
    %v108 = vld [vmem:[#allocation3] sm:$0xff]
    %v109 = vadd.f32 %v96, %v97
    %v110 = vadd.f32 %v108, %v109
    %111 = vst [vmem:[#allocation3] sm:$0xff] %v110
    // Predicated region
    $region30: #{tpu_custom_call.1} parent=1 // pred_check
      %p112 = pneg %p86
    $region31: #{tpu_custom_call.1} parent=1 // pred_check_branch
      %114 = sbr.rel (%p112) target = $region33
    $region32: #{tpu_custom_call.1} parent=1 // pred_region
      %v115 = vld [vmem:[#allocation2] sm:$0xff]
      %116 = vadd.xlane.f32.xlu0 %v115
      %v117 = vpop.xlane.xlu0 %116
      %v118 = vrot.slane %v117, 4
      %v119 = vadd.f32 %v117, %v118
      %v120 = vrot.slane %v119, 2
      %v121 = vadd.f32 %v119, %v120
      %v122 = vrot.slane %v121, 1
      %v123 = vadd.f32 %v121, %v122
      %s124 = vtos %v123
      %v125 = vld [vmem:[#allocation3] sm:$0xff]
      %126 = vadd.xlane.f32.xlu0 %v125
      %v127 = vpop.xlane.xlu0 %126
      %v128 = vrot.slane %v127, 4
      %v129 = vadd.f32 %v127, %v128
      %v130 = vrot.slane %v129, 2
      %v131 = vadd.f32 %v129, %v130
      %v132 = vrot.slane %v131, 1
      %v133 = vadd.f32 %v131, %v132
      %s134 = vtos %v133
      %v135 = vlaneseq
      %v136 = vand.u32 %v135, 127
      %vm137 = vcmp.eq.s32.totalorder %v136, 0
      %vm138 = vcmp.eq.s32.totalorder %v136, 1
      %v139 = vstv %s134
      %v140 = vsel %vm138, %v139, 0.0
      %v141 = vstv %s124
      %v142 = vsel %vm137, %v141, %v140
      %143 = vst [vmem:[#allocation10] sm:$0x1] %v142
    $region33: #{tpu_custom_call.1} parent=1 // pred_fallthru
      _
    // Predicated region
    $region34: #{tpu_custom_call.1} parent=1 // pred_check
      _
    $region35: #{tpu_custom_call.1} parent=1 // pred_check_branch
      %145 = sbr.rel (0) target = $region37
    $region36: #{tpu_custom_call.1} parent=1 // pred_region
      %s147 = ssub.s32 16, 16
      %148 = vsyncadd [#allocation6], %s147
      %s150 = sshll.u32 [#allocation10], 4
      %s151 = int_to_ptr.vmem [resolvable:$true] %s150
      %153 = dma.vmem_to_hbm [thread:$0]  %s151, 16, %s3, [#allocation6]
    $region37: #{tpu_custom_call.1} parent=1 // pred_fallthru
      _
    // Predicated region
    $region38: #{tpu_custom_call.1} parent=1 // pred_check
      _
    $region39: #{tpu_custom_call.1} parent=1 // pred_check_branch
      %155 = sbr.rel (0) target = $region41
    $region40: #{tpu_custom_call.1} parent=1 // pred_region
      %156 = dma.done [#allocation6], 16
    $region41: #{tpu_custom_call.1} parent=1 // pred_fallthru
      _
    %157 = vsyncpa [#allocation5], 1
    %158 = vsyncpa [#allocation8], 1
    %159 = vsyncpa [#allocation6], 1

</llo_original>
